<compile_context>
chip_gen: v7x
topology: tpu7x:2x2x1
jax: 0.10.0
libtpu: 0.0.40
codegen_flags: <defaults>
</compile_context>

<pallas_src>
import functools

import jax
import jax.numpy as jnp
from jax.experimental import pallas as pl
from jax.experimental.pallas import tpu as pltpu


# ----------------------------------------------------------------------------- helpers

def _round_up(n, m):
    return ((n + m - 1) // m) * m


def _pad_rows(x2, rows_p):
    rows = x2.shape[0]
    if rows_p == rows:
        return x2
    return jnp.pad(x2, ((0, rows_p - rows), (0, 0)))


def _row_tiling(rows, max_rows_per_tile=256):
    # Big row tiles (bandwidth), padded to a multiple of 8 sublanes, cdiv grid (no asserts).
    tm = min(max_rows_per_tile, _round_up(rows, 8))
    rows_p = pl.cdiv(rows, tm) * tm
    return tm, rows_p


# ----------------------------------------------------------------------------- kernels

def _rmsnorm_matmul_kernel(x_ref, g_ref, w_ref, o_ref, *, eps):
    """o = rmsnorm(x) @ W   (norm fused into the consumer matmul, all math in f32)."""
    x = x_ref[...].astype(jnp.float32)                       # (tm, D)
    ms = jnp.mean(x * x, axis=-1, keepdims=True)
    xn = x * jax.lax.rsqrt(ms + eps) * g_ref[...].astype(jnp.float32)
    y = jnp.dot(xn, w_ref[...].astype(jnp.float32), preferred_element_type=jnp.float32)
    o_ref[...] = y.astype(o_ref.dtype)


def _attention_kernel(q_ref, k_ref, v_ref, mask_ref, o_ref, *, scale):
    """Per (batch, q-head) scaled-dot-product attention with additive mask."""
    q = q_ref[...].astype(jnp.float32)                       # (S, hd)
    k = k_ref[...].astype(jnp.float32)                       # (S_kv, hd)
    v = v_ref[...].astype(jnp.float32)                       # (S_kv, hd)
    # q @ k^T without an explicit transpose (contract the last dims on the MXU).
    s = jax.lax.dot_general(q, k, (((1,), (1,)), ((), ())),
                            preferred_element_type=jnp.float32) * scale
    s = s + mask_ref[...].astype(jnp.float32)                # (S, S_kv)
    m = jnp.max(s, axis=-1, keepdims=True)
    p = jnp.exp(s - m)
    denom = jnp.sum(p, axis=-1, keepdims=True)
    o = jnp.dot(p, v, preferred_element_type=jnp.float32) / denom
    o_ref[...] = o.astype(o_ref.dtype)


def _matmul_residual_kernel(y_ref, w_ref, res_ref, o_ref):
    """o = residual + y @ W   (output projection fused with the residual add)."""
    acc = jnp.dot(y_ref[...].astype(jnp.float32), w_ref[...].astype(jnp.float32),
                  preferred_element_type=jnp.float32)
    o_ref[...] = (res_ref[...].astype(jnp.float32) + acc).astype(o_ref.dtype)


def _ffn_kernel(x_ref, g_ref, w1_ref, w3_ref, w2_ref, o_ref, *, eps):
    """o = x + W2( silu(W1(rmsnorm(x))) * W3(rmsnorm(x)) )  -- norm + SwiGLU + residual fused."""
    x = x_ref[...].astype(jnp.float32)                       # (tm, D)
    ms = jnp.mean(x * x, axis=-1, keepdims=True)
    xn = x * jax.lax.rsqrt(ms + eps) * g_ref[...].astype(jnp.float32)
    h1 = jnp.dot(xn, w1_ref[...].astype(jnp.float32), preferred_element_type=jnp.float32)
    h3 = jnp.dot(xn, w3_ref[...].astype(jnp.float32), preferred_element_type=jnp.float32)
    sig = 1.0 / (1.0 + jnp.exp(-h1))                         # silu = h1 * sigmoid(h1) (EUP)
    gated = (h1 * sig) * h3
    down = jnp.dot(gated, w2_ref[...].astype(jnp.float32), preferred_element_type=jnp.float32)
    o_ref[...] = (x + down).astype(o_ref.dtype)


# ----------------------------------------------------------------------------- wrappers

def rmsnorm_matmul(x2, g, w_t, eps, *, max_rows_per_tile=256):
    rows, D = x2.shape
    N = w_t.shape[1]
    tm, rows_p = _row_tiling(rows, max_rows_per_tile)
    xp = _pad_rows(x2, rows_p)
    out = pl.pallas_call(
        functools.partial(_rmsnorm_matmul_kernel, eps=eps),
        out_shape=jax.ShapeDtypeStruct((rows_p, N), x2.dtype),
        grid_spec=pltpu.PrefetchScalarGridSpec(
            num_scalar_prefetch=0,
            grid=(rows_p // tm,),
            in_specs=[
                pl.BlockSpec((tm, D), lambda i: (i, 0)),
                pl.BlockSpec((1, D), lambda i: (0, 0)),   # weight stays VMEM-resident
                pl.BlockSpec((D, N), lambda i: (0, 0)),
            ],
            out_specs=pl.BlockSpec((tm, N), lambda i: (i, 0)),
        ),
        compiler_params=pltpu.CompilerParams(dimension_semantics=("parallel",)),
    )(xp, g.reshape(1, D), w_t)
    return out[:rows]


def matmul_residual(y2, w_t, res2, *, max_rows_per_tile=256):
    rows, K = y2.shape
    D = w_t.shape[1]
    tm, rows_p = _row_tiling(rows, max_rows_per_tile)
    yp = _pad_rows(y2, rows_p)
    rp = _pad_rows(res2, rows_p)
    out = pl.pallas_call(
        _matmul_residual_kernel,
        out_shape=jax.ShapeDtypeStruct((rows_p, D), res2.dtype),
        grid_spec=pltpu.PrefetchScalarGridSpec(
            num_scalar_prefetch=0,
            grid=(rows_p // tm,),
            in_specs=[
                pl.BlockSpec((tm, K), lambda i: (i, 0)),
                pl.BlockSpec((K, D), lambda i: (0, 0)),
                pl.BlockSpec((tm, D), lambda i: (i, 0)),
            ],
            out_specs=pl.BlockSpec((tm, D), lambda i: (i, 0)),
        ),
        compiler_params=pltpu.CompilerParams(dimension_semantics=("parallel",)),
    )(yp, w_t, rp)
    return out[:rows]


def ffn_block(h2, g, w1_t, w3_t, w2_t, eps, *, max_rows_per_tile=256):
    rows, D = h2.shape
    F = w1_t.shape[1]
    tm, rows_p = _row_tiling(rows, max_rows_per_tile)
    hp = _pad_rows(h2, rows_p)
    out = pl.pallas_call(
        functools.partial(_ffn_kernel, eps=eps),
        out_shape=jax.ShapeDtypeStruct((rows_p, D), h2.dtype),
        grid_spec=pltpu.PrefetchScalarGridSpec(
            num_scalar_prefetch=0,
            grid=(rows_p // tm,),
            in_specs=[
                pl.BlockSpec((tm, D), lambda i: (i, 0)),
                pl.BlockSpec((1, D), lambda i: (0, 0)),
                pl.BlockSpec((D, F), lambda i: (0, 0)),
                pl.BlockSpec((D, F), lambda i: (0, 0)),
                pl.BlockSpec((F, D), lambda i: (0, 0)),
            ],
            out_specs=pl.BlockSpec((tm, D), lambda i: (i, 0)),
        ),
        compiler_params=pltpu.CompilerParams(dimension_semantics=("parallel",)),
    )(hp, g.reshape(1, D), w1_t, w3_t, w2_t)
    return out[:rows]


def gqa_attention(q, k, v, mask, *, scale):
    """q: (B, H, S, hd);  k, v: (B, KVH, S_kv, hd);  mask: (S, S_kv) additive."""
    B, H, S, hd = q.shape
    KVH, S_kv = k.shape[1], k.shape[2]
    n_rep = H // KVH
    return pl.pallas_call(
        functools.partial(_attention_kernel, scale=scale),
        out_shape=jax.ShapeDtypeStruct((B, H, S, hd), q.dtype),
        grid_spec=pltpu.PrefetchScalarGridSpec(
            num_scalar_prefetch=0,
            grid=(B, H),
            in_specs=[
                pl.BlockSpec((None, None, S, hd), lambda b, h: (b, h, 0, 0)),
                # GQA: query head h reads shared kv head h // n_rep (no repeat_interleave copy).
                pl.BlockSpec((None, None, S_kv, hd), lambda b, h: (b, h // n_rep, 0, 0)),
                pl.BlockSpec((None, None, S_kv, hd), lambda b, h: (b, h // n_rep, 0, 0)),
                pl.BlockSpec((S, S_kv), lambda b, h: (0, 0)),
            ],
            out_specs=pl.BlockSpec((None, None, S, hd), lambda b, h: (b, h, 0, 0)),
        ),
        compiler_params=pltpu.CompilerParams(dimension_semantics=("parallel", "parallel")),
    )(q, k, v, mask)


# ----------------------------------------------------------------------------- module plumbing

def apply_rotary_emb(xq, xk, cos, sin):
    """Matches torch view_as_complex pair rotation. cos/sin: (S, hd//2)."""
    def rot(x):
        xf = x.astype(jnp.float32)
        xr = xf.reshape(*xf.shape[:-1], -1, 2)
        a, b = xr[..., 0], xr[..., 1]
        c = cos[None, :, None, :]
        s = sin[None, :, None, :]
        out = jnp.stack([a * c - b * s, a * s + b * c], axis=-1)
        return out.reshape(xf.shape).astype(x.dtype)
    return rot(xq), rot(xk)


def transformer_encoder_forward(params, x, start_pos, cos, sin, mask, cache_k, cache_v, cfg):
    B, S, D = x.shape
    H, KVH, hd = cfg["n_heads"], cfg["n_kv_heads"], cfg["head_dim"]
    eps = cfg["norm_eps"]
    x2 = x.reshape(B * S, D)

    # --- attention block: fused attention_norm + concatenated QKV projection (lane-dense N) ---
    wqkv_t = jnp.concatenate([params["wq"].T, params["wk"].T, params["wv"].T], axis=1)
    qkv = rmsnorm_matmul(x2, params["attn_norm_w"], wqkv_t, eps)
    q_sz, kv_sz = H * hd, KVH * hd
    q = qkv[:, :q_sz].reshape(B, S, H, hd)
    k = qkv[:, q_sz:q_sz + kv_sz].reshape(B, S, KVH, hd)
    v = qkv[:, q_sz + kv_sz:].reshape(B, S, KVH, hd)

    # RoPE + KV cache (wrapper-side layout plumbing).
    q, k = apply_rotary_emb(q, k, cos, sin)
    cache_k = jax.lax.dynamic_update_slice(cache_k, k, (0, start_pos, 0, 0))
    cache_v = jax.lax.dynamic_update_slice(cache_v, v, (0, start_pos, 0, 0))
    kv_len = start_pos + S
    keys = cache_k[:B, :kv_len]      # (B, kv_len, KVH, hd)
    values = cache_v[:B, :kv_len]

    qT = q.transpose(0, 2, 1, 3)       # (B, H, S, hd)
    kT = keys.transpose(0, 2, 1, 3)    # (B, KVH, kv_len, hd)
    vT = values.transpose(0, 2, 1, 3)

    attn = gqa_attention(qT, kT, vT, mask, scale=1.0 / (hd ** 0.5))
    attn2 = attn.transpose(0, 2, 1, 3).reshape(B * S, H * hd)

    # output projection fused with first residual
    h2 = matmul_residual(attn2, params["wo"].T, x2)

    # --- FFN block: fused ffnn_norm + SwiGLU + down-projection + second residual ---
    out2 = ffn_block(h2, params["ffn_norm_w"], params["w1"].T, params["w3"].T, params["w2"].T, eps)

    return out2.reshape(B, S, D), cache_k, cache_v


# ----------------------------------------------------------------------------- pure-JAX reference

def _rmsnorm_ref(x, w, eps):
    xf = x.astype(jnp.float32)
    inv = jax.lax.rsqrt(jnp.mean(xf * xf, axis=-1, keepdims=True) + eps)
    return (xf * inv).astype(x.dtype) * w


def transformer_encoder_ref(params, x, start_pos, cos, sin, mask, cache_k, cache_v, cfg):
    B, S, D = x.shape
    H, KVH, hd = cfg["n_heads"], cfg["n_kv_heads"], cfg["head_dim"]
    n_rep = H // KVH
    eps = cfg["norm_eps"]

    xn = _rmsnorm_ref(x, params["attn_norm_w"], eps)
    q = (xn @ params["wq"].T).reshape(B, S, H, hd)
    k = (xn @ params["wk"].T).reshape(B, S, KVH, hd)
    v = (xn @ params["wv"].T).reshape(B, S, KVH, hd)
    q, k = apply_rotary_emb(q, k, cos, sin)

    cache_k = jax.lax.dynamic_update_slice(cache_k, k, (0, start_pos, 0, 0))
    cache_v = jax.lax.dynamic_update_slice(cache_v, v, (0, start_pos, 0, 0))
    kv_len = start_pos + S
    keys = jnp.repeat(cache_k[:B, :kv_len], n_rep, axis=2)
    values = jnp.repeat(cache_v[:B, :kv_len], n_rep, axis=2)

    qT = q.transpose(0, 2, 1, 3)
    kT = keys.transpose(0, 2, 1, 3)
    vT = values.transpose(0, 2, 1, 3)
    scores = jnp.einsum("bhqd,bhkd->bhqk", qT, kT) / (hd ** 0.5) + mask
    p = jax.nn.softmax(scores, axis=-1)
    o = jnp.einsum("bhqk,bhkd->bhqd", p, vT)
    o = o.transpose(0, 2, 1, 3).reshape(B, S, H * hd)
    h = x + o @ params["wo"].T

    hn = _rmsnorm_ref(h, params["ffn_norm_w"], eps)
    ffn = (jax.nn.silu(hn @ params["w1"].T) * (hn @ params["w3"].T)) @ params["w2"].T
    return h + ffn


# ----------------------------------------------------------------------------- demo

if __name__ == "__main__":
    # Small but lane-dense config (d_model multiple of 128).
    d_model, n_heads, n_kv_heads = 128, 4, 2
    head_dim = d_model // n_heads              # 32
    ffn_dim = 256
    norm_eps = 1e-5
    rope_theta = 500000.0
    max_batch, max_seq = 2, 16
    batch, seq, start_pos = 2, 8, 0

    cfg = dict(n_heads=n_heads, n_kv_heads=n_kv_heads, head_dim=head_dim, norm_eps=norm_eps)

    key = jax.random.PRNGKey(0)
    ks = jax.random.split(key, 9)

    def linear_w(k, out_f, in_f):
        bound = 1.0 / (in_f ** 0.5)
        return jax.random.uniform(k, (out_f, in_f), jnp.float32, -bound, bound)

    params = {
        "attn_norm_w": jnp.ones((d_model,), jnp.float32),
        "ffn_norm_w": jnp.ones((d_model,), jnp.float32),
        "wq": linear_w(ks[0], n_heads * head_dim, d_model),
        "wk": linear_w(ks[1], n_kv_heads * head_dim, d_model),
        "wv": linear_w(ks[2], n_kv_heads * head_dim, d_model),
        "wo": linear_w(ks[3], d_model, n_heads * head_dim),
        "w1": linear_w(ks[4], ffn_dim, d_model),
        "w3": linear_w(ks[5], ffn_dim, d_model),
        "w2": linear_w(ks[6], d_model, ffn_dim),
    }

    x = jax.random.normal(ks[7], (batch, seq, d_model), jnp.float32)
    cache_k = jnp.zeros((max_batch, max_seq, n_kv_heads, head_dim), jnp.float32)
    cache_v = jnp.zeros_like(cache_k)

    # RoPE tables for positions [start_pos, start_pos + seq)
    inv_freq = 1.0 / (rope_theta ** (jnp.arange(0, head_dim, 2, dtype=jnp.float32) / head_dim))
    t = jnp.arange(start_pos, start_pos + seq, dtype=jnp.float32)
    angles = jnp.outer(t, inv_freq)            # (seq, head_dim // 2)
    cos, sin = jnp.cos(angles), jnp.sin(angles)

    # causal additive mask over kv positions [0, start_pos + seq)
    kv_len = start_pos + seq
    q_pos = start_pos + jnp.arange(seq)[:, None]
    k_pos = jnp.arange(kv_len)[None, :]
    mask = jnp.where(k_pos <= q_pos, 0.0, -1e9).astype(jnp.float32)

    out, _, _ = transformer_encoder_forward(
        params, x, start_pos, cos, sin, mask, cache_k, cache_v, cfg)
    out = jax.block_until_ready(out)

    ref = transformer_encoder_ref(
        params, x, start_pos, cos, sin, mask, cache_k, cache_v, cfg)
    ref = jax.block_until_ready(ref)

    assert out.shape == x.shape and out.dtype == x.dtype
    max_err = float(jnp.max(jnp.abs(out - ref)))
    assert jnp.allclose(out, ref, atol=2e-2, rtol=2e-2), f"max abs err = {max_err}"

    print("KERNEL_OK")
</pallas_src>

<mosaic_0001>
module attributes {stable_mosaic.version = 11 : i64} {
  func.func @_rmsnorm_matmul_kernel(%arg0: i32, %arg1: memref<16x128xf32, #tpu.memory_space<vmem>>, %arg2: memref<1x128xf32, #tpu.memory_space<vmem>>, %arg3: memref<128x256xf32, #tpu.memory_space<vmem>>, %arg4: memref<16x256xf32, #tpu.memory_space<vmem>>) attributes {dimension_semantics = [#tpu.dimension_semantics<parallel>], iteration_bounds = array<i64: 1>, scalar_prefetch = 0 : i64, scratch_operands = 0 : i64, tpu.core_type = #tpu.core_type<tc>, window_params = [{transform_indices = @transform_0, window_bounds = array<i64: 16, 128>}, {pipeline_mode = #tpu.pipeline_mode<synchronous>, transform_indices = @transform_1, window_bounds = array<i64: 1, 128>}, {pipeline_mode = #tpu.pipeline_mode<synchronous>, transform_indices = @transform_2, window_bounds = array<i64: 128, 256>}, {transform_indices = @transform_3, window_bounds = array<i64: 16, 256>}]} {
    %c0 = arith.constant 0 : index
    %c0_0 = arith.constant 0 : index
    %0 = vector.load %arg1[%c0, %c0_0] : memref<16x128xf32, #tpu.memory_space<vmem>>, vector<16x128xf32>
    %1 = arith.mulf %0, %0 : vector<16x128xf32>
    %cst = arith.constant dense<0.000000e+00> : vector<16xf32>
    %2 = vector.multi_reduction <add>, %1, %cst [1] : vector<16x128xf32> to vector<16xf32>
    %3 = vector.shape_cast %2 : vector<16xf32> to vector<16x1xf32>
    %cst_1 = arith.constant 1.280000e+02 : f32
    %4 = vector.broadcast %cst_1 : f32 to vector<16x1xf32>
    %5 = arith.divf %3, %4 : vector<16x1xf32>
    %cst_2 = arith.constant 9.99999974E-6 : f32
    %6 = vector.broadcast %cst_2 : f32 to vector<16x1xf32>
    %7 = arith.addf %5, %6 : vector<16x1xf32>
    %8 = math.rsqrt %7 : vector<16x1xf32>
    %9 = vector.broadcast %8 : vector<16x1xf32> to vector<16x128xf32>
    %10 = arith.mulf %0, %9 : vector<16x128xf32>
    %c0_3 = arith.constant 0 : index
    %c0_4 = arith.constant 0 : index
    %11 = vector.load %arg2[%c0_3, %c0_4] : memref<1x128xf32, #tpu.memory_space<vmem>>, vector<1x128xf32>
    %12 = vector.broadcast %11 : vector<1x128xf32> to vector<16x128xf32>
    %13 = arith.mulf %10, %12 : vector<16x128xf32>
    %c0_5 = arith.constant 0 : index
    %c0_6 = arith.constant 0 : index
    %14 = vector.load %arg3[%c0_5, %c0_6] : memref<128x256xf32, #tpu.memory_space<vmem>>, vector<128x256xf32>
    %cst_7 = arith.constant dense<0.000000e+00> : vector<16x256xf32>
    %15 = tpu.matmul %13, %14, %cst_7 {dimension_numbers = #tpu.dot_dimension_numbers<[1], [0], [0], [1], [0, 0, 1, 1], [], []>} : vector<16x128xf32>, vector<128x256xf32>, vector<16x256xf32> -> vector<16x256xf32>
    %c0_8 = arith.constant 0 : index
    %c0_9 = arith.constant 0 : index
    %16 = vector.load %arg4[%c0_8, %c0_9] : memref<16x256xf32, #tpu.memory_space<vmem>>, vector<16x256xf32>
    tpu.vector_store %arg4[%c0_8, %c0_9], %15 {strides = array<i32>} : memref<16x256xf32, #tpu.memory_space<vmem>>, vector<16x256xf32>,
    return
  }
  func.func @transform_0(%arg0: i32) -> (i32, i32) {
    %c0_i32 = arith.constant 0 : i32
    %c0_i32_0 = arith.constant 0 : i32
    return %arg0, %c0_i32 : i32, i32
  }
  func.func @transform_1(%arg0: i32) -> (i32, i32) {
    %c0_i32 = arith.constant 0 : i32
    %c0_i32_0 = arith.constant 0 : i32
    %c0_i32_1 = arith.constant 0 : i32
    return %c0_i32, %c0_i32_0 : i32, i32
  }
  func.func @transform_2(%arg0: i32) -> (i32, i32) {
    %c0_i32 = arith.constant 0 : i32
    %c0_i32_0 = arith.constant 0 : i32
    %c0_i32_1 = arith.constant 0 : i32
    return %c0_i32, %c0_i32_0 : i32, i32
  }
  func.func @transform_3(%arg0: i32) -> (i32, i32) {
    %c0_i32 = arith.constant 0 : i32
    %c0_i32_0 = arith.constant 0 : i32
    return %arg0, %c0_i32 : i32, i32
  }
}

</mosaic_0001>

<llo_original>
// kernel: tpu_custom_call.1
$region0: #{tpu_custom_call.1}
  #allocation0 [shape = 'u32[]', space=smem, size = 0x4, offset = 0x4, fixed_abs, tag = 'smem constant byte address 0x4 - core index']
  #allocation1 [shape = 'u32[144,128]{1,0:T(1,128)}', space=vmem, size = 0x12000, scoped, tag = 'internal scratch']
  %s0 = inlined_call_operand.hbm [shape: f32[16,128], index: 0, kind: input, shape index: {}]
  %s1 = inlined_call_operand.vmem [shape: f32[1,128], index: 1, kind: input, shape index: {}]
  %s2 = inlined_call_operand.hbm [shape: f32[128,256], index: 2, kind: input, shape index: {}]
  %s3 = inlined_call_operand.hbm [shape: f32[16,256], index: 3, kind: output, shape index: {}]
  %s4 = sld [smem:[#allocation0]]
  $region30: #{tpu_custom_call.1} parent=0
    _
  %s6 = ssub.s32 1, %s4
  %s7 = scalar_select 0, %s6, %s4
  $region1: #{tpu_custom_call.1} parent=0
    #allocation2 [shape = 'u8[8192]{0}', space=vmem, size = 0x2000, scoped, tag = 'input window, operand 0, single buffered']
    #allocation3 [shape = 's32[1]{0}', space=sflag, size = 0x4, scoped, tag = 'scoped memory for tpu_custom_call.1']
    #allocation4 [shape = 's32[1]{0}', space=sflag, size = 0x4, scoped, tag = 'scoped memory for tpu_custom_call.1']
    #allocation5 [shape = 'u8[131072]{0}', space=vmem, size = 0x20000, scoped, tag = 'input window, operand 2, single buffered']
    #allocation6 [shape = 's32[1]{0}', space=sflag, size = 0x4, scoped, tag = 'scoped memory for tpu_custom_call.1']
    #allocation7 [shape = 'u8[16384]{0}', space=vmem, size = 0x4000, scoped, tag = 'output window, operand 0, single buffered']
    %8 = vsyncpa [#allocation3], 0
    %9 = vsyncpa [#allocation6], 0
    %10 = vsyncpa [#allocation4], 0
    // Predicated region
    $region2: #{tpu_custom_call.1} parent=1 // pred_check
      _
    $region3: #{tpu_custom_call.1} parent=1 // pred_check_branch
      %12 = sbr.rel (0) target = $region5
    $region4: #{tpu_custom_call.1} parent=1 // pred_region
      %s14 = ssub.s32 256, 256
      %15 = vsyncadd [#allocation3], %s14
      %s16 = sshll.u32 [#allocation2], 4
      %s17 = int_to_ptr.vmem [resolvable:$true] %s16
      %22 = dma.hbm_to_vmem [thread:$0]  %s0, 256, %s17, [#allocation3], 128, 128, 8
    $region5: #{tpu_custom_call.1} parent=1 // pred_fallthru
      _
    // Predicated region
    $region6: #{tpu_custom_call.1} parent=1 // pred_check
      _
    $region7: #{tpu_custom_call.1} parent=1 // pred_check_branch
      %24 = sbr.rel (0) target = $region9
    $region8: #{tpu_custom_call.1} parent=1 // pred_region
      _
    $region9: #{tpu_custom_call.1} parent=1 // pred_fallthru
      _
    // Predicated region
    $region10: #{tpu_custom_call.1} parent=1 // pred_check
      _
    $region11: #{tpu_custom_call.1} parent=1 // pred_check_branch
      %26 = sbr.rel (0) target = $region13
    $region12: #{tpu_custom_call.1} parent=1 // pred_region
      %s28 = ssub.s32 4096, 4096
      %29 = vsyncadd [#allocation6], %s28
      %s30 = sshll.u32 [#allocation5], 4
      %s31 = int_to_ptr.vmem [resolvable:$true] %s30
      %36 = dma.hbm_to_vmem [thread:$0]  %s2, 4096, %s31, [#allocation6], 256, 256, 16
    $region13: #{tpu_custom_call.1} parent=1 // pred_fallthru
      _
    // Predicated region
    $region14: #{tpu_custom_call.1} parent=1 // pred_check
      _
    $region15: #{tpu_custom_call.1} parent=1 // pred_check_branch
      %38 = sbr.rel (0) target = $region17
    $region16: #{tpu_custom_call.1} parent=1 // pred_region
      %39 = dma.done [#allocation3], 256
    $region17: #{tpu_custom_call.1} parent=1 // pred_fallthru
      _
    // Predicated region
    $region18: #{tpu_custom_call.1} parent=1 // pred_check
      _
    $region19: #{tpu_custom_call.1} parent=1 // pred_check_branch
      %41 = sbr.rel (0) target = $region21
    $region20: #{tpu_custom_call.1} parent=1 // pred_region
      %42 = dma.done [#allocation6], 4096
    $region21: #{tpu_custom_call.1} parent=1 // pred_fallthru
      _
    %v43 = vld [vmem:[#allocation2] sm:$0xff]
    %v44 = vld [vmem:[#allocation2 + $0x8] sm:$0xff]
    %v45 = vmul.f32 %v43, %v43
    %v46 = vmul.f32 %v44, %v44
    %47 = vadd.xlane.f32.xlu0 %v45
    %v48 = vpop.xlane.xlu0 %47
    %49 = vadd.xlane.f32.xlu0 %v46
    %v50 = vpop.xlane.xlu0 %49
    %v51 = vrcp.pop 128.0
    %v52 = vmul.f32 %v48, %v51
    %v53 = vmul.f32 %v50, %v51
    %v54 = vadd.f32 %v52, 1e-05
    %v55 = vadd.f32 %v53, 1e-05
    %v56 = vrsqrt.pop %v54
    %v57 = vrsqrt.pop %v55
    %v58 = vmul.f32 %v43, %v56
    %v59 = vmul.f32 %v44, %v57
    %v60 = vld [vmem:[%s1] sm:$0x1]
    %v62 = vlaneseq
    %v63 = vshrl.u32 %v62, 7
    %v64 = vsub.s32 0, %v63
    %v65 = vrot.slane %v60, %v64
    %v67 = vmul.f32 %v58, %v65
    %v68 = vmul.f32 %v59, %v65
    %v69 = vld [vmem:[#allocation5] sm:$0xff]
    %v70 = vld [vmem:[#allocation5 + $0x8] sm:$0xff]
    %v71 = vld [vmem:[#allocation5 + $0x10] sm:$0xff]
    %v72 = vld [vmem:[#allocation5 + $0x18] sm:$0xff]
    %v73 = vld [vmem:[#allocation5 + $0x20] sm:$0xff]
    %v74 = vld [vmem:[#allocation5 + $0x28] sm:$0xff]
    %v75 = vld [vmem:[#allocation5 + $0x30] sm:$0xff]
    %v76 = vld [vmem:[#allocation5 + $0x38] sm:$0xff]
    %v77 = vld [vmem:[#allocation5 + $0x40] sm:$0xff]
    %v78 = vld [vmem:[#allocation5 + $0x48] sm:$0xff]
    %v79 = vld [vmem:[#allocation5 + $0x50] sm:$0xff]
    %v80 = vld [vmem:[#allocation5 + $0x58] sm:$0xff]
    %v81 = vld [vmem:[#allocation5 + $0x60] sm:$0xff]
    %v82 = vld [vmem:[#allocation5 + $0x68] sm:$0xff]
    %v83 = vld [vmem:[#allocation5 + $0x70] sm:$0xff]
    %v84 = vld [vmem:[#allocation5 + $0x78] sm:$0xff]
    %v85 = vld [vmem:[#allocation5 + $0x80] sm:$0xff]
    %v86 = vld [vmem:[#allocation5 + $0x88] sm:$0xff]
    %v87 = vld [vmem:[#allocation5 + $0x90] sm:$0xff]
    %v88 = vld [vmem:[#allocation5 + $0x98] sm:$0xff]
    %v89 = vld [vmem:[#allocation5 + $0xa0] sm:$0xff]
    %v90 = vld [vmem:[#allocation5 + $0xa8] sm:$0xff]
    %v91 = vld [vmem:[#allocation5 + $0xb0] sm:$0xff]
    %v92 = vld [vmem:[#allocation5 + $0xb8] sm:$0xff]
    %v93 = vld [vmem:[#allocation5 + $0xc0] sm:$0xff]
    %v94 = vld [vmem:[#allocation5 + $0xc8] sm:$0xff]
    %v95 = vld [vmem:[#allocation5 + $0xd0] sm:$0xff]
    %v96 = vld [vmem:[#allocation5 + $0xd8] sm:$0xff]
    %v97 = vld [vmem:[#allocation5 + $0xe0] sm:$0xff]
    %v98 = vld [vmem:[#allocation5 + $0xe8] sm:$0xff]
    %v99 = vld [vmem:[#allocation5 + $0xf0] sm:$0xff]
    %v100 = vld [vmem:[#allocation5 + $0xf8] sm:$0xff]
    %101 = vmatprep.subr.mxu0 %v70
    %102 = vmatpush1.msra.mxu0 %v69
    %103 = vmatprep.subr.mxu0 %v72
    %104 = vmatpush1.msra.mxu0 %v71
    %105 = vmatprep.subr.mxu0 %v74
    %106 = vmatpush1.msra.mxu0 %v73
    %107 = vmatprep.subr.mxu0 %v76
    %108 = vmatpush1.msra.mxu0 %v75
    %109 = vmatprep.subr.mxu0 %v78
    %110 = vmatpush1.msra.mxu0 %v77
    %111 = vmatprep.subr.mxu0 %v80
    %112 = vmatpush1.msra.mxu0 %v79
    %113 = vmatprep.subr.mxu0 %v82
    %114 = vmatpush1.msra.mxu0 %v81
    %115 = vmatprep.subr.mxu0 %v84
    %116 = vmatpush1.msra.mxu0 %v83
    %117 = vmatprep.subr.mxu0 %v86
    %118 = vmatpush1.msra.mxu0 %v85
    %119 = vmatprep.subr.mxu0 %v88
    %120 = vmatpush1.msra.mxu0 %v87
    %121 = vmatprep.subr.mxu0 %v90
    %122 = vmatpush1.msra.mxu0 %v89
    %123 = vmatprep.subr.mxu0 %v92
    %124 = vmatpush1.msra.mxu0 %v91
    %125 = vmatprep.subr.mxu0 %v94
    %126 = vmatpush1.msra.mxu0 %v93
    %127 = vmatprep.subr.mxu0 %v96
    %128 = vmatpush1.msra.mxu0 %v95
    %129 = vmatprep.subr.mxu0 %v98
    %130 = vmatpush1.msra.mxu0 %v97
    %131 = vmatprep.subr.mxu0 %v100
    %132 = vmatpush1.msra.mxu0 %v99
    %133 = vmatprep.subr.mxu0 0.0
    %134 = vmatpush1.msra.mxu0 0.0
    %135 = vmatprep.subr.mxu0 0.0
    %136 = vmatpush1.msra.mxu0 0.0
    %137 = vmatprep.subr.mxu0 0.0
    %138 = vmatpush1.msra.mxu0 0.0
    %139 = vmatprep.subr.mxu0 0.0
    %140 = vmatpush1.msra.mxu0 0.0
    %141 = vmatprep.subr.mxu0 0.0
    %142 = vmatpush1.msra.mxu0 0.0
    %143 = vmatprep.subr.mxu0 0.0
    %144 = vmatpush1.msra.mxu0 0.0
    %145 = vmatprep.subr.mxu0 0.0
    %146 = vmatpush1.msra.mxu0 0.0
    %147 = vmatprep.subr.mxu0 0.0
    %148 = vmatpush1.msra.mxu0 0.0
    %149 = vmatprep.subr.mxu0 0.0
    %150 = vmatpush1.msra.mxu0 0.0
    %151 = vmatprep.subr.mxu0 0.0
    %152 = vmatpush1.msra.mxu0 0.0
    %153 = vmatprep.subr.mxu0 0.0
    %154 = vmatpush1.msra.mxu0 0.0
    %155 = vmatprep.subr.mxu0 0.0
    %156 = vmatpush1.msra.mxu0 0.0
    %157 = vmatprep.subr.mxu0 0.0
    %158 = vmatpush1.msra.mxu0 0.0
    %159 = vmatprep.subr.mxu0 0.0
    %160 = vmatpush1.msra.mxu0 0.0
    %161 = vmatprep.subr.mxu0 0.0
    %162 = vmatpush1.msra.mxu0 0.0
    %163 = vmatprep.subr.mxu0 0.0
    %164 = vmatpush1.msra.mxu0 0.0
    %165 = vmatprep.mubr.f32.mxu0 0.0
    %166 = vmatmul.mubr.f32.gmra.mrb[0].mxu0 %v67
    %v167 = vpop.f32.mrb[0].mxu0
    %v168 = vadd.f32 0.0, %v167
    %v169 = vpop.f32.mrb[0].mxu0
    %v170 = vadd.f32 0.0, %v169
    %171 = vmatprep.mubr.f32.mxu0 0.0
    %172 = vmatmul.mubr.f32.gmra.mrb[0].mxu0 %v68
    %v173 = vpop.f32.mrb[0].mxu0
    %v174 = vadd.f32 0.0, %v173
    %v175 = vpop.f32.mrb[0].mxu0
    %v176 = vadd.f32 0.0, %v175
    %177 = vdwg.mxu0
    %178 = vst [vmem:[#allocation7] sm:$0xff] %v168
    %179 = vst [vmem:[#allocation7 + $0x8] sm:$0xff] %v170
    %180 = vst [vmem:[#allocation7 + $0x10] sm:$0xff] %v174
    %181 = vst [vmem:[#allocation7 + $0x18] sm:$0xff] %v176
    // Predicated region
    $region22: #{tpu_custom_call.1} parent=1 // pred_check
      _
    $region23: #{tpu_custom_call.1} parent=1 // pred_check_branch
      %183 = sbr.rel (0) target = $region25
    $region24: #{tpu_custom_call.1} parent=1 // pred_region
      %s185 = ssub.s32 512, 512
      %186 = vsyncadd [#allocation4], %s185
      %s187 = sshll.u32 [#allocation7], 4
      %s188 = int_to_ptr.vmem [resolvable:$true] %s187
      %193 = dma.vmem_to_hbm [thread:$0]  %s188, 512, %s3, [#allocation4], 256, 256, 16
    $region25: #{tpu_custom_call.1} parent=1 // pred_fallthru
      _
    // Predicated region
    $region26: #{tpu_custom_call.1} parent=1 // pred_check
      _
    $region27: #{tpu_custom_call.1} parent=1 // pred_check_branch
      %195 = sbr.rel (0) target = $region29
    $region28: #{tpu_custom_call.1} parent=1 // pred_region
      %196 = dma.done [#allocation4], 512
    $region29: #{tpu_custom_call.1} parent=1 // pred_fallthru
      _
    %197 = vsyncpa [#allocation3], 1
    %198 = vsyncpa [#allocation6], 1
    %199 = vsyncpa [#allocation4], 1

</llo_original>
